<compile_context>
chip_gen: v6e
topology: v6e:2x2x1
jax: 0.10.0
libtpu: 0.0.40
codegen_flags: <defaults>
</compile_context>

<pallas_src>
import jax
import jax.numpy as jnp
from jax import lax
from jax.experimental import pallas as pl
from jax.experimental.pallas import tpu as pltpu


_LANES = 1024                       # lane-dense last dim -> unmasked vst
_TILE_ROWS = 512                    # 512 x 1024 f32 = 2 MiB block
_PALLAS_MIN_SLAB_BYTES = 128 * 1024  # below this, fused XLA path wins
_TC_SPLIT_SLAB_BYTES = 512 * 1024    # above this, ensure grid >= 2 (v7x, 2 TCs)


def _crelu_kernel(x_ref, o_ref):
    # Elementwise ReLU on the real/imag float32 slab (VPU). HBM-bound.
    o_ref[...] = jnp.maximum(x_ref[...], 0.0)


def crelu(x):
    """CReLU: relu(x.real) + 1j * relu(x.imag). Any shape, returns complex64."""
    # Module contract is complex64 output (complex128 inputs are downcast).
    x = x.astype(jnp.complex64)
    orig_shape = x.shape

    slab_bytes = 2 * x.size * 4     # two f32 planes
    if slab_bytes < _PALLAS_MIN_SLAB_BYTES:
        # Tiny input: one fused XLA pass; skip the pallas_call boundary.
        return lax.complex(jnp.maximum(jnp.real(x), 0.0),
                           jnp.maximum(jnp.imag(x), 0.0))

    # One fused deinterleave pass -> (2, *orig) f32 (real plane, imag plane).
    # real/imag of complex64 are already float32 (no extra astype pass).
    planes = jnp.stack([jnp.real(x), jnp.imag(x)], axis=0)
    n = planes.size
    flat = planes.reshape(-1)

    rows = pl.cdiv(n, _LANES)
    rows8 = pl.cdiv(rows, 8) * 8          # minimal sublane padding only
    padded = rows8 * _LANES
    if padded != n:
        # <= 8*1024-1 extra elems; fuses into the stack fusion (not a full pass).
        flat = jnp.pad(flat, (0, padded - n))   # relu(0) == 0 -> padding inert
    slab = flat.reshape(rows8, _LANES)

    tile_rows = _TILE_ROWS
    if slab_bytes > _TC_SPLIT_SLAB_BYTES:
        # Guarantee >= 2 grid steps so the "parallel" axis actually has work
        # to shard across both v7x TensorCores.
        while tile_rows > 8 and rows8 <= tile_rows:
            tile_rows //= 2
    else:
        tile_rows = min(tile_rows, rows8)     # one block covers the whole slab

    # Ragged last block (rows8 % tile_rows != 0) is masked by Pallas; the few
    # OOB rows it may read are never written back and are sliced off below.
    grid = (pl.cdiv(rows8, tile_rows),)
    spec = pl.BlockSpec((tile_rows, _LANES), lambda i: (i, 0))

    out = pl.pallas_call(
        _crelu_kernel,
        out_shape=jax.ShapeDtypeStruct((rows8, _LANES), jnp.float32),
        grid_spec=pl.GridSpec(grid=grid, in_specs=[spec], out_specs=spec),
        input_output_aliases={0: 0},          # rewrite the slab in place
        compiler_params=pltpu.CompilerParams(
            dimension_semantics=("parallel",)),
    )(slab)

    out_flat = out.reshape(-1)
    if padded != n:
        out_flat = out_flat[:n]
    out_planes = out_flat.reshape(2, *orig_shape)
    # One fused reinterleave pass back to complex64.
    return lax.complex(out_planes[0], out_planes[1])


if __name__ == "__main__":
    key = jax.random.PRNGKey(0)
    k1, k2, k3, k4 = jax.random.split(key, 4)

    # Small NCHW activation (module-typical) -> fused-XLA short-circuit path.
    small_shape = (2, 4, 16, 16)
    x_small = lax.complex(jax.random.normal(k1, small_shape, dtype=jnp.float32),
                          jax.random.normal(k2, small_shape, dtype=jnp.float32))

    # Moderate activation -> Pallas kernel path (256 KiB slab, 64x1024 tile).
    big_shape = (2, 4, 64, 64)
    x_big = lax.complex(jax.random.normal(k3, big_shape, dtype=jnp.float32),
                        jax.random.normal(k4, big_shape, dtype=jnp.float32))

    out_small = jax.block_until_ready(crelu(x_small))
    out_big = jax.block_until_ready(crelu(x_big))

    # Reference check (plain JAX) against the PyTorch module semantics.
    for x, out in ((x_small, out_small), (x_big, out_big)):
        ref = (jax.nn.relu(jnp.real(x))
               + 1j * jax.nn.relu(jnp.imag(x))).astype(jnp.complex64)
        assert out.shape == x.shape and out.dtype == jnp.complex64
        assert jnp.allclose(out, ref, atol=1e-7, rtol=1e-7)

    print("KERNEL_OK")
</pallas_src>

<mosaic_0001>
module attributes {stable_mosaic.version = 11 : i64} {
  func.func @_crelu_kernel(%arg0: i32, %arg1: memref<64x1024xf32, #tpu.memory_space<vmem>>, %arg2: memref<64x1024xf32, #tpu.memory_space<vmem>>) attributes {dimension_semantics = [#tpu.dimension_semantics<parallel>], iteration_bounds = array<i64: 1>, scalar_prefetch = 0 : i64, scratch_operands = 0 : i64, tpu.core_type = #tpu.core_type<tc>, window_params = [{transform_indices = @transform_0, window_bounds = array<i64: 64, 1024>}, {transform_indices = @transform_1, window_bounds = array<i64: 64, 1024>}]} {
    %c0 = arith.constant 0 : index
    %c0_0 = arith.constant 0 : index
    %0 = vector.load %arg1[%c0, %c0_0] : memref<64x1024xf32, #tpu.memory_space<vmem>>, vector<64x1024xf32>
    %cst = arith.constant 0.000000e+00 : f32
    %1 = vector.broadcast %cst : f32 to vector<64x1024xf32>
    %2 = arith.maximumf %0, %1 : vector<64x1024xf32>
    %c0_1 = arith.constant 0 : index
    %c0_2 = arith.constant 0 : index
    %3 = vector.load %arg2[%c0_1, %c0_2] : memref<64x1024xf32, #tpu.memory_space<vmem>>, vector<64x1024xf32>
    tpu.vector_store %arg2[%c0_1, %c0_2], %2 {strides = array<i32>} : memref<64x1024xf32, #tpu.memory_space<vmem>>, vector<64x1024xf32>,
    return
  }
  func.func @transform_0(%arg0: i32) -> (i32, i32) {
    %c0_i32 = arith.constant 0 : i32
    %c0_i32_0 = arith.constant 0 : i32
    return %arg0, %c0_i32 : i32, i32
  }
  func.func @transform_1(%arg0: i32) -> (i32, i32) {
    %c0_i32 = arith.constant 0 : i32
    %c0_i32_0 = arith.constant 0 : i32
    return %arg0, %c0_i32 : i32, i32
  }
}

</mosaic_0001>

<llo_original>
// kernel: tpu_custom_call.1
$region0: #{tpu_custom_call.1}
  #allocation0 [shape = 'u32[]', space=smem, size = 0x4, offset = 0x4, fixed_abs, tag = 'smem constant byte address 0x4 - core index']
  #allocation1 [shape = 'u32[144,128]{1,0:T(1,128)}', space=vmem, size = 0x12000, scoped, tag = 'internal scratch']
  %s0 = inlined_call_operand.hbm [shape: f32[64,1024], index: 0, kind: input, shape index: {}, may-alias: {0,1}]
  %s1 = inlined_call_operand.hbm [shape: f32[64,1024], index: 1, kind: output, shape index: {}, may-alias: {0,1}]
  %s2 = sld [smem:[#allocation0]]
  $region18: #{tpu_custom_call.1} parent=0
    _
  %s4 = ssub.s32 1, %s2
  %s5 = scalar_select 0, %s4, %s2
  $region1: #{tpu_custom_call.1} parent=0
    #allocation2 [shape = 'u8[262144]{0}', space=vmem, size = 0x40000, scoped, tag = 'input window, operand 0, single buffered']
    #allocation3 [shape = 's32[1]{0}', space=sflag, size = 0x4, scoped, tag = 'scoped memory for tpu_custom_call.1']
    #allocation4 [shape = 's32[1]{0}', space=sflag, size = 0x4, scoped, tag = 'scoped memory for tpu_custom_call.1']
    #allocation5 [shape = 'u8[262144]{0}', space=vmem, size = 0x40000, scoped, tag = 'output window, operand 0, single buffered']
    %6 = vsyncpa [#allocation3], 0
    %7 = vsyncpa [#allocation4], 0
    // Predicated region
    $region2: #{tpu_custom_call.1} parent=1 // pred_check
      _
    $region3: #{tpu_custom_call.1} parent=1 // pred_check_branch
      %9 = sbr.rel (0) target = $region5
    $region4: #{tpu_custom_call.1} parent=1 // pred_region
      %s11 = ssub.s32 8192, 8192
      %12 = vsyncadd [#allocation3], %s11
      %s13 = sshll.u32 [#allocation2], 4
      %s14 = int_to_ptr.vmem [resolvable:$true] %s13
      %19 = dma.hbm_to_vmem [thread:$0]  %s0, 8192, %s14, [#allocation3], 1024, 1024, 64
    $region5: #{tpu_custom_call.1} parent=1 // pred_fallthru
      _
    // Predicated region
    $region6: #{tpu_custom_call.1} parent=1 // pred_check
      _
    $region7: #{tpu_custom_call.1} parent=1 // pred_check_branch
      %21 = sbr.rel (0) target = $region9
    $region8: #{tpu_custom_call.1} parent=1 // pred_region
      %22 = dma.done [#allocation3], 8192
    $region9: #{tpu_custom_call.1} parent=1 // pred_fallthru
      _
    %v23 = vld [vmem:[#allocation2] sm:$0xff]
    %v24 = vld [vmem:[#allocation2 + $0x8] sm:$0xff]
    %v25 = vld [vmem:[#allocation2 + $0x10] sm:$0xff]
    %v26 = vld [vmem:[#allocation2 + $0x18] sm:$0xff]
    %v27 = vld [vmem:[#allocation2 + $0x20] sm:$0xff]
    %v28 = vld [vmem:[#allocation2 + $0x28] sm:$0xff]
    %v29 = vld [vmem:[#allocation2 + $0x30] sm:$0xff]
    %v30 = vld [vmem:[#allocation2 + $0x38] sm:$0xff]
    %v31 = vld [vmem:[#allocation2 + $0x40] sm:$0xff]
    %v32 = vld [vmem:[#allocation2 + $0x48] sm:$0xff]
    %v33 = vld [vmem:[#allocation2 + $0x50] sm:$0xff]
    %v34 = vld [vmem:[#allocation2 + $0x58] sm:$0xff]
    %v35 = vld [vmem:[#allocation2 + $0x60] sm:$0xff]
    %v36 = vld [vmem:[#allocation2 + $0x68] sm:$0xff]
    %v37 = vld [vmem:[#allocation2 + $0x70] sm:$0xff]
    %v38 = vld [vmem:[#allocation2 + $0x78] sm:$0xff]
    %v39 = vld [vmem:[#allocation2 + $0x80] sm:$0xff]
    %v40 = vld [vmem:[#allocation2 + $0x88] sm:$0xff]
    %v41 = vld [vmem:[#allocation2 + $0x90] sm:$0xff]
    %v42 = vld [vmem:[#allocation2 + $0x98] sm:$0xff]
    %v43 = vld [vmem:[#allocation2 + $0xa0] sm:$0xff]
    %v44 = vld [vmem:[#allocation2 + $0xa8] sm:$0xff]
    %v45 = vld [vmem:[#allocation2 + $0xb0] sm:$0xff]
    %v46 = vld [vmem:[#allocation2 + $0xb8] sm:$0xff]
    %v47 = vld [vmem:[#allocation2 + $0xc0] sm:$0xff]
    %v48 = vld [vmem:[#allocation2 + $0xc8] sm:$0xff]
    %v49 = vld [vmem:[#allocation2 + $0xd0] sm:$0xff]
    %v50 = vld [vmem:[#allocation2 + $0xd8] sm:$0xff]
    %v51 = vld [vmem:[#allocation2 + $0xe0] sm:$0xff]
    %v52 = vld [vmem:[#allocation2 + $0xe8] sm:$0xff]
    %v53 = vld [vmem:[#allocation2 + $0xf0] sm:$0xff]
    %v54 = vld [vmem:[#allocation2 + $0xf8] sm:$0xff]
    %v55 = vld [vmem:[#allocation2 + $0x100] sm:$0xff]
    %v56 = vld [vmem:[#allocation2 + $0x108] sm:$0xff]
    %v57 = vld [vmem:[#allocation2 + $0x110] sm:$0xff]
    %v58 = vld [vmem:[#allocation2 + $0x118] sm:$0xff]
    %v59 = vld [vmem:[#allocation2 + $0x120] sm:$0xff]
    %v60 = vld [vmem:[#allocation2 + $0x128] sm:$0xff]
    %v61 = vld [vmem:[#allocation2 + $0x130] sm:$0xff]
    %v62 = vld [vmem:[#allocation2 + $0x138] sm:$0xff]
    %v63 = vld [vmem:[#allocation2 + $0x140] sm:$0xff]
    %v64 = vld [vmem:[#allocation2 + $0x148] sm:$0xff]
    %v65 = vld [vmem:[#allocation2 + $0x150] sm:$0xff]
    %v66 = vld [vmem:[#allocation2 + $0x158] sm:$0xff]
    %v67 = vld [vmem:[#allocation2 + $0x160] sm:$0xff]
    %v68 = vld [vmem:[#allocation2 + $0x168] sm:$0xff]
    %v69 = vld [vmem:[#allocation2 + $0x170] sm:$0xff]
    %v70 = vld [vmem:[#allocation2 + $0x178] sm:$0xff]
    %v71 = vld [vmem:[#allocation2 + $0x180] sm:$0xff]
    %v72 = vld [vmem:[#allocation2 + $0x188] sm:$0xff]
    %v73 = vld [vmem:[#allocation2 + $0x190] sm:$0xff]
    %v74 = vld [vmem:[#allocation2 + $0x198] sm:$0xff]
    %v75 = vld [vmem:[#allocation2 + $0x1a0] sm:$0xff]
    %v76 = vld [vmem:[#allocation2 + $0x1a8] sm:$0xff]
    %v77 = vld [vmem:[#allocation2 + $0x1b0] sm:$0xff]
    %v78 = vld [vmem:[#allocation2 + $0x1b8] sm:$0xff]
    %v79 = vld [vmem:[#allocation2 + $0x1c0] sm:$0xff]
    %v80 = vld [vmem:[#allocation2 + $0x1c8] sm:$0xff]
    %v81 = vld [vmem:[#allocation2 + $0x1d0] sm:$0xff]
    %v82 = vld [vmem:[#allocation2 + $0x1d8] sm:$0xff]
    %v83 = vld [vmem:[#allocation2 + $0x1e0] sm:$0xff]
    %v84 = vld [vmem:[#allocation2 + $0x1e8] sm:$0xff]
    %v85 = vld [vmem:[#allocation2 + $0x1f0] sm:$0xff]
    %v86 = vld [vmem:[#allocation2 + $0x1f8] sm:$0xff]
    %v87 = vmax.f32 %v23, 0.0
    %v88 = vmax.f32 %v24, 0.0
    %v89 = vmax.f32 %v25, 0.0
    %v90 = vmax.f32 %v26, 0.0
    %v91 = vmax.f32 %v27, 0.0
    %v92 = vmax.f32 %v28, 0.0
    %v93 = vmax.f32 %v29, 0.0
    %v94 = vmax.f32 %v30, 0.0
    %v95 = vmax.f32 %v31, 0.0
    %v96 = vmax.f32 %v32, 0.0
    %v97 = vmax.f32 %v33, 0.0
    %v98 = vmax.f32 %v34, 0.0
    %v99 = vmax.f32 %v35, 0.0
    %v100 = vmax.f32 %v36, 0.0
    %v101 = vmax.f32 %v37, 0.0
    %v102 = vmax.f32 %v38, 0.0
    %v103 = vmax.f32 %v39, 0.0
    %v104 = vmax.f32 %v40, 0.0
    %v105 = vmax.f32 %v41, 0.0
    %v106 = vmax.f32 %v42, 0.0
    %v107 = vmax.f32 %v43, 0.0
    %v108 = vmax.f32 %v44, 0.0
    %v109 = vmax.f32 %v45, 0.0
    %v110 = vmax.f32 %v46, 0.0
    %v111 = vmax.f32 %v47, 0.0
    %v112 = vmax.f32 %v48, 0.0
    %v113 = vmax.f32 %v49, 0.0
    %v114 = vmax.f32 %v50, 0.0
    %v115 = vmax.f32 %v51, 0.0
    %v116 = vmax.f32 %v52, 0.0
    %v117 = vmax.f32 %v53, 0.0
    %v118 = vmax.f32 %v54, 0.0
    %v119 = vmax.f32 %v55, 0.0
    %v120 = vmax.f32 %v56, 0.0
    %v121 = vmax.f32 %v57, 0.0
    %v122 = vmax.f32 %v58, 0.0
    %v123 = vmax.f32 %v59, 0.0
    %v124 = vmax.f32 %v60, 0.0
    %v125 = vmax.f32 %v61, 0.0
    %v126 = vmax.f32 %v62, 0.0
    %v127 = vmax.f32 %v63, 0.0
    %v128 = vmax.f32 %v64, 0.0
    %v129 = vmax.f32 %v65, 0.0
    %v130 = vmax.f32 %v66, 0.0
    %v131 = vmax.f32 %v67, 0.0
    %v132 = vmax.f32 %v68, 0.0
    %v133 = vmax.f32 %v69, 0.0
    %v134 = vmax.f32 %v70, 0.0
    %v135 = vmax.f32 %v71, 0.0
    %v136 = vmax.f32 %v72, 0.0
    %v137 = vmax.f32 %v73, 0.0
    %v138 = vmax.f32 %v74, 0.0
    %v139 = vmax.f32 %v75, 0.0
    %v140 = vmax.f32 %v76, 0.0
    %v141 = vmax.f32 %v77, 0.0
    %v142 = vmax.f32 %v78, 0.0
    %v143 = vmax.f32 %v79, 0.0
    %v144 = vmax.f32 %v80, 0.0
    %v145 = vmax.f32 %v81, 0.0
    %v146 = vmax.f32 %v82, 0.0
    %v147 = vmax.f32 %v83, 0.0
    %v148 = vmax.f32 %v84, 0.0
    %v149 = vmax.f32 %v85, 0.0
    %v150 = vmax.f32 %v86, 0.0
    %151 = vst [vmem:[#allocation5] sm:$0xff] %v87
    %152 = vst [vmem:[#allocation5 + $0x8] sm:$0xff] %v88
    %153 = vst [vmem:[#allocation5 + $0x10] sm:$0xff] %v89
    %154 = vst [vmem:[#allocation5 + $0x18] sm:$0xff] %v90
    %155 = vst [vmem:[#allocation5 + $0x20] sm:$0xff] %v91
    %156 = vst [vmem:[#allocation5 + $0x28] sm:$0xff] %v92
    %157 = vst [vmem:[#allocation5 + $0x30] sm:$0xff] %v93
    %158 = vst [vmem:[#allocation5 + $0x38] sm:$0xff] %v94
    %159 = vst [vmem:[#allocation5 + $0x40] sm:$0xff] %v95
    %160 = vst [vmem:[#allocation5 + $0x48] sm:$0xff] %v96
    %161 = vst [vmem:[#allocation5 + $0x50] sm:$0xff] %v97
    %162 = vst [vmem:[#allocation5 + $0x58] sm:$0xff] %v98
    %163 = vst [vmem:[#allocation5 + $0x60] sm:$0xff] %v99
    %164 = vst [vmem:[#allocation5 + $0x68] sm:$0xff] %v100
    %165 = vst [vmem:[#allocation5 + $0x70] sm:$0xff] %v101
    %166 = vst [vmem:[#allocation5 + $0x78] sm:$0xff] %v102
    %167 = vst [vmem:[#allocation5 + $0x80] sm:$0xff] %v103
    %168 = vst [vmem:[#allocation5 + $0x88] sm:$0xff] %v104
    %169 = vst [vmem:[#allocation5 + $0x90] sm:$0xff] %v105
    %170 = vst [vmem:[#allocation5 + $0x98] sm:$0xff] %v106
    %171 = vst [vmem:[#allocation5 + $0xa0] sm:$0xff] %v107
    %172 = vst [vmem:[#allocation5 + $0xa8] sm:$0xff] %v108
    %173 = vst [vmem:[#allocation5 + $0xb0] sm:$0xff] %v109
    %174 = vst [vmem:[#allocation5 + $0xb8] sm:$0xff] %v110
    %175 = vst [vmem:[#allocation5 + $0xc0] sm:$0xff] %v111
    %176 = vst [vmem:[#allocation5 + $0xc8] sm:$0xff] %v112
    %177 = vst [vmem:[#allocation5 + $0xd0] sm:$0xff] %v113
    %178 = vst [vmem:[#allocation5 + $0xd8] sm:$0xff] %v114
    %179 = vst [vmem:[#allocation5 + $0xe0] sm:$0xff] %v115
    %180 = vst [vmem:[#allocation5 + $0xe8] sm:$0xff] %v116
    %181 = vst [vmem:[#allocation5 + $0xf0] sm:$0xff] %v117
    %182 = vst [vmem:[#allocation5 + $0xf8] sm:$0xff] %v118
    %183 = vst [vmem:[#allocation5 + $0x100] sm:$0xff] %v119
    %184 = vst [vmem:[#allocation5 + $0x108] sm:$0xff] %v120
    %185 = vst [vmem:[#allocation5 + $0x110] sm:$0xff] %v121
    %186 = vst [vmem:[#allocation5 + $0x118] sm:$0xff] %v122
    %187 = vst [vmem:[#allocation5 + $0x120] sm:$0xff] %v123
    %188 = vst [vmem:[#allocation5 + $0x128] sm:$0xff] %v124
    %189 = vst [vmem:[#allocation5 + $0x130] sm:$0xff] %v125
    %190 = vst [vmem:[#allocation5 + $0x138] sm:$0xff] %v126
    %191 = vst [vmem:[#allocation5 + $0x140] sm:$0xff] %v127
    %192 = vst [vmem:[#allocation5 + $0x148] sm:$0xff] %v128
    %193 = vst [vmem:[#allocation5 + $0x150] sm:$0xff] %v129
    %194 = vst [vmem:[#allocation5 + $0x158] sm:$0xff] %v130
    %195 = vst [vmem:[#allocation5 + $0x160] sm:$0xff] %v131
    %196 = vst [vmem:[#allocation5 + $0x168] sm:$0xff] %v132
    %197 = vst [vmem:[#allocation5 + $0x170] sm:$0xff] %v133
    %198 = vst [vmem:[#allocation5 + $0x178] sm:$0xff] %v134
    %199 = vst [vmem:[#allocation5 + $0x180] sm:$0xff] %v135
    %200 = vst [vmem:[#allocation5 + $0x188] sm:$0xff] %v136
    %201 = vst [vmem:[#allocation5 + $0x190] sm:$0xff] %v137
    %202 = vst [vmem:[#allocation5 + $0x198] sm:$0xff] %v138
    %203 = vst [vmem:[#allocation5 + $0x1a0] sm:$0xff] %v139
    %204 = vst [vmem:[#allocation5 + $0x1a8] sm:$0xff] %v140
    %205 = vst [vmem:[#allocation5 + $0x1b0] sm:$0xff] %v141
    %206 = vst [vmem:[#allocation5 + $0x1b8] sm:$0xff] %v142
    %207 = vst [vmem:[#allocation5 + $0x1c0] sm:$0xff] %v143
    %208 = vst [vmem:[#allocation5 + $0x1c8] sm:$0xff] %v144
    %209 = vst [vmem:[#allocation5 + $0x1d0] sm:$0xff] %v145
    %210 = vst [vmem:[#allocation5 + $0x1d8] sm:$0xff] %v146
    %211 = vst [vmem:[#allocation5 + $0x1e0] sm:$0xff] %v147
    %212 = vst [vmem:[#allocation5 + $0x1e8] sm:$0xff] %v148
    %213 = vst [vmem:[#allocation5 + $0x1f0] sm:$0xff] %v149
    %214 = vst [vmem:[#allocation5 + $0x1f8] sm:$0xff] %v150
    // Predicated region
    $region10: #{tpu_custom_call.1} parent=1 // pred_check
      _
    $region11: #{tpu_custom_call.1} parent=1 // pred_check_branch
      %216 = sbr.rel (0) target = $region13
    $region12: #{tpu_custom_call.1} parent=1 // pred_region
      %s218 = ssub.s32 8192, 8192
      %219 = vsyncadd [#allocation4], %s218
      %s220 = sshll.u32 [#allocation5], 4
      %s221 = int_to_ptr.vmem [resolvable:$true] %s220
      %226 = dma.vmem_to_hbm [thread:$0]  %s221, 8192, %s1, [#allocation4], 1024, 1024, 64
    $region13: #{tpu_custom_call.1} parent=1 // pred_fallthru
      _
    // Predicated region
    $region14: #{tpu_custom_call.1} parent=1 // pred_check
      _
    $region15: #{tpu_custom_call.1} parent=1 // pred_check_branch
      %228 = sbr.rel (0) target = $region17
    $region16: #{tpu_custom_call.1} parent=1 // pred_region
      %229 = dma.done [#allocation4], 8192
    $region17: #{tpu_custom_call.1} parent=1 // pred_fallthru
      _
    %230 = vsyncpa [#allocation3], 1
    %231 = vsyncpa [#allocation4], 1

</llo_original>
